<compile_context>
chip_gen: v6e
topology: v6e:2x2x1
jax: 0.10.0
libtpu: 0.0.40
codegen_flags: <defaults>
</compile_context>

<pallas_src>
import jax
import jax.numpy as jnp
from jax.experimental import pallas as pl
from jax.experimental.pallas import tpu as pltpu


def _round_up(a, m):
    return (a + m - 1) // m * m


def actor_dense_kernel(x_ref, ts_ref, w1_ref, b1_ref,
                       w2a_ref, w2b_ref, b2_ref,
                       emb_ref, wc_ref, bc_ref,
                       out_ref,
                       h2_buf):
    j = pl.program_id(1)          # items tile index

    # h1 / h2 depend only on the batch tile; compute once per batch tile
    # (j == 0) and keep h2 resident in VMEM scratch for the remaining item tiles.
    @pl.when(j == 0)
    def _():
        tb = x_ref.shape[0]
        msp = emb_ref.shape[0]

        # Embedding gather as an exact one-hot matmul on the MXU.
        ts = ts_ref[...]                                           # (tb, 1) int32
        cols = jax.lax.broadcasted_iota(jnp.int32, (tb, msp), 1)   # (tb, msp)
        one_hot = (cols == ts).astype(jnp.bfloat16)                # exact 0 / 1
        emb = jnp.dot(one_hot, emb_ref[...],
                      preferred_element_type=jnp.float32)          # (tb, 256)

        # fc1 + relu   (bf16 operands, f32 accumulate on the MXU)
        h1 = jnp.dot(x_ref[...], w1_ref[...],
                     preferred_element_type=jnp.float32)
        h1 = jnp.maximum(h1 + b1_ref[...], 0.0)

        # fc2 on concat([h1, emb]) == h1 @ W2a + emb @ W2b (W2 split on input dim)
        h2 = jnp.dot(h1.astype(jnp.bfloat16), w2a_ref[...],
                     preferred_element_type=jnp.float32)
        h2 = h2 + jnp.dot(emb.astype(jnp.bfloat16), w2b_ref[...],
                          preferred_element_type=jnp.float32)
        h2_buf[...] = jnp.maximum(h2 + b2_ref[...], 0.0).astype(jnp.bfloat16)

    # fc_count tile + sigmoid * 30
    logits = jnp.dot(h2_buf[...], wc_ref[...],
                     preferred_element_type=jnp.float32) + bc_ref[...]
    out_ref[...] = jax.nn.sigmoid(logits) * 30.0


def actor_dense_forward(x, timestep, params, *, tb=32, tn=512):
    """x: (B, state_dim) f32, timestep: (B, 1) int32 (matches the PyTorch B > 1 path)."""
    B, S = x.shape
    w1, b1 = params["w1"], params["b1"]              # (S, 256) bf16, (1, 256) f32
    w2a, w2b = params["w2a"], params["w2b"]          # (256, 128) bf16 each
    b2 = params["b2"]                                # (1, 128) f32
    wc, bc = params["wc"], params["bc"]              # (128, items) bf16, (1, items) f32
    emb_table = params["emb_table"]                  # (max_steps, 256) bf16
    items = wc.shape[1]
    max_steps = emb_table.shape[0]

    # Tile / padding choices: lane-dense (multiple-of-128) feature dims,
    # sublane-aligned batch tiles.
    tb = min(tb, max(16, _round_up(B, 8)))
    b_pad = _round_up(B, tb)
    s_pad = _round_up(S, 128)
    tn = min(tn, _round_up(items, 128))
    n_pad = _round_up(items, tn)
    ms_pad = _round_up(max_steps, 128)
    grid = (b_pad // tb, n_pad // tn)

    # Zero padding is mathematically inert; padded outputs are sliced off below.
    x_p = jnp.pad(x.astype(jnp.bfloat16), ((0, b_pad - B), (0, s_pad - S)))
    w1_p = jnp.pad(w1, ((0, s_pad - S), (0, 0)))
    wc_p = jnp.pad(wc, ((0, 0), (0, n_pad - items)))
    bc_p = jnp.pad(bc, ((0, 0), (0, n_pad - items)))
    ts_p = jnp.pad(timestep[:, :1].astype(jnp.int32), ((0, b_pad - B), (0, 0)))
    emb_p = jnp.pad(emb_table, ((0, ms_pad - max_steps), (0, 0)))

    const = lambda a: pl.BlockSpec(a.shape, lambda i, j: (0,) * a.ndim)

    out = pl.pallas_call(
        actor_dense_kernel,
        out_shape=jax.ShapeDtypeStruct((b_pad, n_pad), jnp.float32),
        grid_spec=pltpu.PrefetchScalarGridSpec(
            num_scalar_prefetch=0,
            grid=grid,
            in_specs=[
                pl.BlockSpec((tb, s_pad), lambda i, j: (i, 0)),      # x tile
                pl.BlockSpec((tb, 1), lambda i, j: (i, 0)),          # timestep tile
                const(w1_p), const(b1),                              # fc1 (VMEM resident)
                const(w2a), const(w2b), const(b2),                   # fc2 (VMEM resident)
                const(emb_p),                                        # embedding table (VMEM resident)
                pl.BlockSpec((128, tn), lambda i, j: (0, j)),        # wc tile
                pl.BlockSpec((1, tn), lambda i, j: (0, j)),          # bc tile
            ],
            out_specs=pl.BlockSpec((tb, tn), lambda i, j: (i, j)),
            scratch_shapes=[
                pltpu.VMEM((tb, 128), jnp.bfloat16),                 # cached h2
            ],
        ),
        compiler_params=pltpu.CompilerParams(
            dimension_semantics=("parallel", "arbitrary"),
        ),
    )(x_p, ts_p, w1_p, b1, w2a, w2b, b2, emb_p, wc_p, bc_p)

    return out[:B, :items]


def init_params(key, state_dim, items_count, max_steps):
    ks = jax.random.split(key, 7)

    def xavier(k, fan_in, fan_out):
        limit = jnp.sqrt(6.0 / (fan_in + fan_out))
        return jax.random.uniform(k, (fan_in, fan_out), jnp.float32, -limit, limit)

    # fc1: Linear(state_dim, 256), xavier_uniform weight
    w1 = xavier(ks[0], state_dim, 256).astype(jnp.bfloat16)
    b1 = jax.random.uniform(ks[1], (1, 256), jnp.float32, -0.05, 0.05)
    # fc2: Linear(512, 128) -> split the 512-input weight into two 256-row halves
    w2 = jax.random.uniform(ks[2], (512, 128), jnp.float32, -0.044, 0.044).astype(jnp.bfloat16)
    w2a, w2b = w2[:256], w2[256:]
    b2 = jax.random.uniform(ks[3], (1, 128), jnp.float32, -0.044, 0.044)
    # fc_count: Linear(128, items_count), xavier_uniform weight
    wc = xavier(ks[4], 128, items_count).astype(jnp.bfloat16)
    bc = jax.random.uniform(ks[5], (1, items_count), jnp.float32, -0.088, 0.088)
    # embedding1: Embedding(max_steps, 256), N(0, 1) init
    emb_table = jax.random.normal(ks[6], (max_steps, 256), jnp.float32).astype(jnp.bfloat16)

    return {"w1": w1, "b1": b1, "w2a": w2a, "w2b": w2b, "b2": b2,
            "wc": wc, "bc": bc, "emb_table": emb_table}


if __name__ == "__main__":
    # Small, module-consistent shapes (B > 1, matching the PyTorch squeeze() path).
    B = 4
    state_dim = 32          # state_shape = (32,)
    items_count = 8
    max_steps = 100

    key = jax.random.PRNGKey(0)
    k_x, k_t, k_p = jax.random.split(key, 3)

    x = jax.random.normal(k_x, (B, state_dim), jnp.float32)
    timestep = jax.random.randint(k_t, (B, 1), 0, max_steps, jnp.int32)
    params = init_params(k_p, state_dim, items_count, max_steps)

    forward = jax.jit(actor_dense_forward)
    count = forward(x, timestep, params)
    jax.block_until_ready(count)

    # Pure-JAX reference of the same math (bf16 MXU operands, f32 accumulation).
    bf = jnp.bfloat16
    f32 = jnp.float32
    emb = params["emb_table"][timestep[:, 0]]
    h1 = jax.nn.relu(jnp.dot(x.astype(bf), params["w1"], preferred_element_type=f32)
                     + params["b1"])
    h2 = jax.nn.relu(jnp.dot(h1.astype(bf), params["w2a"], preferred_element_type=f32)
                     + jnp.dot(emb, params["w2b"], preferred_element_type=f32)
                     + params["b2"])
    ref = jax.nn.sigmoid(jnp.dot(h2.astype(bf), params["wc"], preferred_element_type=f32)
                         + params["bc"]) * 30.0

    assert count.shape == (B, items_count)
    assert jnp.allclose(count, ref, atol=2e-2, rtol=2e-2), float(jnp.max(jnp.abs(count - ref)))

    # TODO(synk): arch='lstm' branch (3-layer nn.LSTM) not implemented; only the 'dense' arch.
    print("KERNEL_OK")
</pallas_src>

<mosaic_0001>
module attributes {stable_mosaic.version = 11 : i64} {
  func.func @actor_dense_kernel(%arg0: i32, %arg1: i32, %arg2: memref<16x128xbf16, #tpu.memory_space<vmem>>, %arg3: memref<16x1xi32, #tpu.memory_space<vmem>>, %arg4: memref<128x256xbf16, #tpu.memory_space<vmem>>, %arg5: memref<1x256xf32, #tpu.memory_space<vmem>>, %arg6: memref<256x128xbf16, #tpu.memory_space<vmem>>, %arg7: memref<256x128xbf16, #tpu.memory_space<vmem>>, %arg8: memref<1x128xf32, #tpu.memory_space<vmem>>, %arg9: memref<128x256xbf16, #tpu.memory_space<vmem>>, %arg10: memref<128x128xbf16, #tpu.memory_space<vmem>>, %arg11: memref<1x128xf32, #tpu.memory_space<vmem>>, %arg12: memref<16x128xf32, #tpu.memory_space<vmem>>, %arg13: memref<16x128xbf16, #tpu.memory_space<vmem>>) attributes {dimension_semantics = [#tpu.dimension_semantics<parallel>, #tpu.dimension_semantics<arbitrary>], iteration_bounds = array<i64: 1, 1>, scalar_prefetch = 0 : i64, scratch_operands = 1 : i64, tpu.core_type = #tpu.core_type<tc>, window_params = [{transform_indices = @transform_0, window_bounds = array<i64: 16, 128>}, {transform_indices = @transform_1, window_bounds = array<i64: 16, 1>}, {pipeline_mode = #tpu.pipeline_mode<synchronous>, transform_indices = @transform_2, window_bounds = array<i64: 128, 256>}, {pipeline_mode = #tpu.pipeline_mode<synchronous>, transform_indices = @transform_3, window_bounds = array<i64: 1, 256>}, {pipeline_mode = #tpu.pipeline_mode<synchronous>, transform_indices = @transform_4, window_bounds = array<i64: 256, 128>}, {pipeline_mode = #tpu.pipeline_mode<synchronous>, transform_indices = @transform_5, window_bounds = array<i64: 256, 128>}, {pipeline_mode = #tpu.pipeline_mode<synchronous>, transform_indices = @transform_6, window_bounds = array<i64: 1, 128>}, {pipeline_mode = #tpu.pipeline_mode<synchronous>, transform_indices = @transform_7, window_bounds = array<i64: 128, 256>}, {transform_indices = @transform_8, window_bounds = array<i64: 128, 128>}, {transform_indices = @transform_9, window_bounds = array<i64: 1, 128>}, {transform_indices = @transform_10, window_bounds = array<i64: 16, 128>}]} {
    %c0_i32 = arith.constant 0 : i32
    %0 = arith.cmpi eq, %arg1, %c0_i32 : i32
    %1 = arith.extui %0 : i1 to i32
    %c0_i32_0 = arith.constant 0 : i32
    %2 = arith.cmpi ne, %1, %c0_i32_0 : i32
    scf.if %2 {
      %c0_10 = arith.constant 0 : index
      %c0_11 = arith.constant 0 : index
      %17 = vector.load %arg3[%c0_10, %c0_11] : memref<16x1xi32, #tpu.memory_space<vmem>>, vector<16x1xi32>
      %18 = tpu.iota {dimensions = array<i32: 1>} : vector<16x128xi32>
      %19 = vector.broadcast %17 : vector<16x1xi32> to vector<16x128xi32>
      %20 = arith.cmpi eq, %18, %19 : vector<16x128xi32>
      %21 = arith.extui %20 : vector<16x128xi1> to vector<16x128xi32>
      %22 = arith.sitofp %21 : vector<16x128xi32> to vector<16x128xf32>
      %23 = arith.truncf %22 : vector<16x128xf32> to vector<16x128xbf16>
      %c0_12 = arith.constant 0 : index
      %c0_13 = arith.constant 0 : index
      %24 = vector.load %arg9[%c0_12, %c0_13] : memref<128x256xbf16, #tpu.memory_space<vmem>>, vector<128x256xbf16>
      %cst_14 = arith.constant dense<0.000000e+00> : vector<16x256xf32>
      %25 = tpu.matmul %23, %24, %cst_14 {dimension_numbers = #tpu.dot_dimension_numbers<[1], [0], [0], [1], [0, 0, 1, 1], [], []>} : vector<16x128xbf16>, vector<128x256xbf16>, vector<16x256xf32> -> vector<16x256xf32>
      %c0_15 = arith.constant 0 : index
      %c0_16 = arith.constant 0 : index
      %26 = vector.load %arg2[%c0_15, %c0_16] : memref<16x128xbf16, #tpu.memory_space<vmem>>, vector<16x128xbf16>
      %c0_17 = arith.constant 0 : index
      %c0_18 = arith.constant 0 : index
      %27 = vector.load %arg4[%c0_17, %c0_18] : memref<128x256xbf16, #tpu.memory_space<vmem>>, vector<128x256xbf16>
      %cst_19 = arith.constant dense<0.000000e+00> : vector<16x256xf32>
      %28 = tpu.matmul %26, %27, %cst_19 {dimension_numbers = #tpu.dot_dimension_numbers<[1], [0], [0], [1], [0, 0, 1, 1], [], []>} : vector<16x128xbf16>, vector<128x256xbf16>, vector<16x256xf32> -> vector<16x256xf32>
      %c0_20 = arith.constant 0 : index
      %c0_21 = arith.constant 0 : index
      %29 = vector.load %arg5[%c0_20, %c0_21] : memref<1x256xf32, #tpu.memory_space<vmem>>, vector<1x256xf32>
      %30 = vector.broadcast %29 : vector<1x256xf32> to vector<16x256xf32>
      %31 = arith.addf %28, %30 : vector<16x256xf32>
      %cst_22 = arith.constant 0.000000e+00 : f32
      %32 = vector.broadcast %cst_22 : f32 to vector<16x256xf32>
      %33 = arith.maximumf %31, %32 : vector<16x256xf32>
      %34 = arith.truncf %33 : vector<16x256xf32> to vector<16x256xbf16>
      %c0_23 = arith.constant 0 : index
      %c0_24 = arith.constant 0 : index
      %35 = vector.load %arg6[%c0_23, %c0_24] : memref<256x128xbf16, #tpu.memory_space<vmem>>, vector<256x128xbf16>
      %cst_25 = arith.constant dense<0.000000e+00> : vector<16x128xf32>
      %36 = tpu.matmul %34, %35, %cst_25 {dimension_numbers = #tpu.dot_dimension_numbers<[1], [0], [0], [1], [0, 0, 1, 1], [], []>} : vector<16x256xbf16>, vector<256x128xbf16>, vector<16x128xf32> -> vector<16x128xf32>
      %37 = arith.truncf %25 : vector<16x256xf32> to vector<16x256xbf16>
      %c0_26 = arith.constant 0 : index
      %c0_27 = arith.constant 0 : index
      %38 = vector.load %arg7[%c0_26, %c0_27] : memref<256x128xbf16, #tpu.memory_space<vmem>>, vector<256x128xbf16>
      %cst_28 = arith.constant dense<0.000000e+00> : vector<16x128xf32>
      %39 = tpu.matmul %37, %38, %cst_28 {dimension_numbers = #tpu.dot_dimension_numbers<[1], [0], [0], [1], [0, 0, 1, 1], [], []>} : vector<16x256xbf16>, vector<256x128xbf16>, vector<16x128xf32> -> vector<16x128xf32>
      %40 = arith.addf %36, %39 : vector<16x128xf32>
      %c0_29 = arith.constant 0 : index
      %c0_30 = arith.constant 0 : index
      %41 = vector.load %arg8[%c0_29, %c0_30] : memref<1x128xf32, #tpu.memory_space<vmem>>, vector<1x128xf32>
      %42 = vector.broadcast %41 : vector<1x128xf32> to vector<16x128xf32>
      %43 = arith.addf %40, %42 : vector<16x128xf32>
      %cst_31 = arith.constant 0.000000e+00 : f32
      %44 = vector.broadcast %cst_31 : f32 to vector<16x128xf32>
      %45 = arith.maximumf %43, %44 : vector<16x128xf32>
      %46 = arith.truncf %45 : vector<16x128xf32> to vector<16x128xbf16>
      %c0_32 = arith.constant 0 : index
      %c0_33 = arith.constant 0 : index
      %47 = vector.load %arg13[%c0_32, %c0_33] : memref<16x128xbf16, #tpu.memory_space<vmem>>, vector<16x128xbf16>
      tpu.vector_store %arg13[%c0_32, %c0_33], %46 {strides = array<i32>} : memref<16x128xbf16, #tpu.memory_space<vmem>>, vector<16x128xbf16>,
    } else {
    }
    %c0 = arith.constant 0 : index
    %c0_1 = arith.constant 0 : index
    %3 = vector.load %arg13[%c0, %c0_1] : memref<16x128xbf16, #tpu.memory_space<vmem>>, vector<16x128xbf16>
    %c0_2 = arith.constant 0 : index
    %c0_3 = arith.constant 0 : index
    %4 = vector.load %arg10[%c0_2, %c0_3] : memref<128x128xbf16, #tpu.memory_space<vmem>>, vector<128x128xbf16>
    %cst = arith.constant dense<0.000000e+00> : vector<16x128xf32>
    %5 = tpu.matmul %3, %4, %cst {dimension_numbers = #tpu.dot_dimension_numbers<[1], [0], [0], [1], [0, 0, 1, 1], [], []>} : vector<16x128xbf16>, vector<128x128xbf16>, vector<16x128xf32> -> vector<16x128xf32>
    %c0_4 = arith.constant 0 : index
    %c0_5 = arith.constant 0 : index
    %6 = vector.load %arg11[%c0_4, %c0_5] : memref<1x128xf32, #tpu.memory_space<vmem>>, vector<1x128xf32>
    %7 = vector.broadcast %6 : vector<1x128xf32> to vector<16x128xf32>
    %8 = arith.addf %5, %7 : vector<16x128xf32>
    %9 = arith.negf %8 : vector<16x128xf32>
    %10 = math.exp %9 : vector<16x128xf32>
    %cst_6 = arith.constant 1.000000e+00 : f32
    %11 = vector.broadcast %cst_6 : f32 to vector<16x128xf32>
    %12 = arith.addf %11, %10 : vector<16x128xf32>
    %13 = arith.divf %11, %12 : vector<16x128xf32>
    %cst_7 = arith.constant 3.000000e+01 : f32
    %14 = vector.broadcast %cst_7 : f32 to vector<16x128xf32>
    %15 = arith.mulf %13, %14 : vector<16x128xf32>
    %c0_8 = arith.constant 0 : index
    %c0_9 = arith.constant 0 : index
    %16 = vector.load %arg12[%c0_8, %c0_9] : memref<16x128xf32, #tpu.memory_space<vmem>>, vector<16x128xf32>
    tpu.vector_store %arg12[%c0_8, %c0_9], %15 {strides = array<i32>} : memref<16x128xf32, #tpu.memory_space<vmem>>, vector<16x128xf32>,
    return
  }
  func.func @transform_0(%arg0: i32, %arg1: i32) -> (i32, i32) {
    %c0_i32 = arith.constant 0 : i32
    %c0_i32_0 = arith.constant 0 : i32
    return %arg0, %c0_i32 : i32, i32
  }
  func.func @transform_1(%arg0: i32, %arg1: i32) -> (i32, i32) {
    %c0_i32 = arith.constant 0 : i32
    %c0_i32_0 = arith.constant 0 : i32
    return %arg0, %c0_i32 : i32, i32
  }
  func.func @transform_2(%arg0: i32, %arg1: i32) -> (i32, i32) {
    %c0_i32 = arith.constant 0 : i32
    %c0_i32_0 = arith.constant 0 : i32
    %c0_i32_1 = arith.constant 0 : i32
    return %c0_i32, %c0_i32_0 : i32, i32
  }
  func.func @transform_3(%arg0: i32, %arg1: i32) -> (i32, i32) {
    %c0_i32 = arith.constant 0 : i32
    %c0_i32_0 = arith.constant 0 : i32
    %c0_i32_1 = arith.constant 0 : i32
    return %c0_i32, %c0_i32_0 : i32, i32
  }
  func.func @transform_4(%arg0: i32, %arg1: i32) -> (i32, i32) {
    %c0_i32 = arith.constant 0 : i32
    %c0_i32_0 = arith.constant 0 : i32
    %c0_i32_1 = arith.constant 0 : i32
    return %c0_i32, %c0_i32_0 : i32, i32
  }
  func.func @transform_5(%arg0: i32, %arg1: i32) -> (i32, i32) {
    %c0_i32 = arith.constant 0 : i32
    %c0_i32_0 = arith.constant 0 : i32
    %c0_i32_1 = arith.constant 0 : i32
    return %c0_i32, %c0_i32_0 : i32, i32
  }
  func.func @transform_6(%arg0: i32, %arg1: i32) -> (i32, i32) {
    %c0_i32 = arith.constant 0 : i32
    %c0_i32_0 = arith.constant 0 : i32
    %c0_i32_1 = arith.constant 0 : i32
    return %c0_i32, %c0_i32_0 : i32, i32
  }
  func.func @transform_7(%arg0: i32, %arg1: i32) -> (i32, i32) {
    %c0_i32 = arith.constant 0 : i32
    %c0_i32_0 = arith.constant 0 : i32
    %c0_i32_1 = arith.constant 0 : i32
    return %c0_i32, %c0_i32_0 : i32, i32
  }
  func.func @transform_8(%arg0: i32, %arg1: i32) -> (i32, i32) {
    %c0_i32 = arith.constant 0 : i32
    %c0_i32_0 = arith.constant 0 : i32
    return %c0_i32, %arg1 : i32, i32
  }
  func.func @transform_9(%arg0: i32, %arg1: i32) -> (i32, i32) {
    %c0_i32 = arith.constant 0 : i32
    %c0_i32_0 = arith.constant 0 : i32
    return %c0_i32, %arg1 : i32, i32
  }
  func.func @transform_10(%arg0: i32, %arg1: i32) -> (i32, i32) {
    %c0_i32 = arith.constant 0 : i32
    return %arg0, %arg1 : i32, i32
  }
}

</mosaic_0001>

<llo_original>
// kernel: actor_dense_forward.1
$region0: #{actor_dense_forward.1}
  #allocation0 [shape = 'u32[]', space=smem, size = 0x4, offset = 0x4, fixed_abs, tag = 'smem constant byte address 0x4 - core index']
  #allocation1 [shape = 'u32[144,128]{1,0:T(1,128)}', space=vmem, size = 0x12000, scoped, tag = 'internal scratch']
  #allocation2 [shape = 'bf16[16,128]{1,0:T(8,128)(2,1)}', space=vmem, size = 0x1000, scoped, tag = 'scratch operand']
  %s0 = inlined_call_operand.vmem [shape: bf16[16,128], index: 0, kind: input, shape index: {}]
  %s1 = inlined_call_operand.vmem [shape: s32[16,1], index: 1, kind: input, shape index: {}]
  %s2 = inlined_call_operand.vmem [shape: bf16[128,256], index: 2, kind: input, shape index: {}]
  %s3 = inlined_call_operand.vmem [shape: f32[1,256], index: 3, kind: input, shape index: {}]
  %s4 = inlined_call_operand.vmem [shape: bf16[256,128], index: 4, kind: input, shape index: {}]
  %s5 = inlined_call_operand.vmem [shape: bf16[256,128], index: 5, kind: input, shape index: {}]
  %s6 = inlined_call_operand.vmem [shape: f32[1,128], index: 6, kind: input, shape index: {}]
  %s7 = inlined_call_operand.vmem [shape: bf16[128,256], index: 7, kind: input, shape index: {}]
  %s8 = inlined_call_operand.vmem [shape: bf16[128,128], index: 8, kind: input, shape index: {}]
  %s9 = inlined_call_operand.vmem [shape: f32[1,128], index: 9, kind: input, shape index: {}]
  %s10 = inlined_call_operand.vmem [shape: f32[16,128], index: 10, kind: output, shape index: {}]
  %s11 = sld [smem:[#allocation0]]
  $region54: #{actor_dense_forward.1} parent=0
    _
  %s13 = ssub.s32 1, %s11
  %s14 = scalar_select 0, %s13, %s11
  // Predicated region
  $region2: #{actor_dense_forward.1} parent=0 // pred_check
    _
  $region3: #{actor_dense_forward.1} parent=0 // pred_check_branch
    %16 = sbr.rel (0) target = $region5
  $region4: #{actor_dense_forward.1} parent=0 // pred_region
    _
  $region5: #{actor_dense_forward.1} parent=0 // pred_fallthru
    _
  // Predicated region
  $region6: #{actor_dense_forward.1} parent=0 // pred_check
    _
  $region7: #{actor_dense_forward.1} parent=0 // pred_check_branch
    %18 = sbr.rel (0) target = $region9
  $region8: #{actor_dense_forward.1} parent=0 // pred_region
    _
  $region9: #{actor_dense_forward.1} parent=0 // pred_fallthru
    _
  // Predicated region
  $region10: #{actor_dense_forward.1} parent=0 // pred_check
    _
  $region11: #{actor_dense_forward.1} parent=0 // pred_check_branch
    %20 = sbr.rel (0) target = $region13
  $region12: #{actor_dense_forward.1} parent=0 // pred_region
    _
  $region13: #{actor_dense_forward.1} parent=0 // pred_fallthru
    _
  // Predicated region
  $region14: #{actor_dense_forward.1} parent=0 // pred_check
    _
  $region15: #{actor_dense_forward.1} parent=0 // pred_check_branch
    %22 = sbr.rel (0) target = $region17
  $region16: #{actor_dense_forward.1} parent=0 // pred_region
    _
  $region17: #{actor_dense_forward.1} parent=0 // pred_fallthru
    _
  // Predicated region
  $region18: #{actor_dense_forward.1} parent=0 // pred_check
    _
  $region19: #{actor_dense_forward.1} parent=0 // pred_check_branch
    %24 = sbr.rel (0) target = $region21
  $region20: #{actor_dense_forward.1} parent=0 // pred_region
    _
  $region21: #{actor_dense_forward.1} parent=0 // pred_fallthru
    _
  // Predicated region
  $region22: #{actor_dense_forward.1} parent=0 // pred_check
    _
  $region23: #{actor_dense_forward.1} parent=0 // pred_check_branch
    %26 = sbr.rel (0) target = $region25
  $region24: #{actor_dense_forward.1} parent=0 // pred_region
    _
  $region25: #{actor_dense_forward.1} parent=0 // pred_fallthru
    _
  // Predicated region
  $region26: #{actor_dense_forward.1} parent=0 // pred_check
    _
  $region27: #{actor_dense_forward.1} parent=0 // pred_check_branch
    %28 = sbr.rel (0) target = $region29
  $region28: #{actor_dense_forward.1} parent=0 // pred_region
    _
  $region29: #{actor_dense_forward.1} parent=0 // pred_fallthru
    _
  // Predicated region
  $region30: #{actor_dense_forward.1} parent=0 // pred_check
    _
  $region31: #{actor_dense_forward.1} parent=0 // pred_check_branch
    %30 = sbr.rel (0) target = $region33
  $region32: #{actor_dense_forward.1} parent=0 // pred_region
    _
  $region33: #{actor_dense_forward.1} parent=0 // pred_fallthru
    _
  // Predicated region
  $region34: #{actor_dense_forward.1} parent=0 // pred_check
    _
  $region35: #{actor_dense_forward.1} parent=0 // pred_check_branch
    %32 = sbr.rel (0) target = $region37
  $region36: #{actor_dense_forward.1} parent=0 // pred_region
    _
  $region37: #{actor_dense_forward.1} parent=0 // pred_fallthru
    _
  // Predicated region
  $region38: #{actor_dense_forward.1} parent=0 // pred_check
    _
  $region39: #{actor_dense_forward.1} parent=0 // pred_check_branch
    %34 = sbr.rel (0) target = $region41
  $region40: #{actor_dense_forward.1} parent=0 // pred_region
    _
  $region41: #{actor_dense_forward.1} parent=0 // pred_fallthru
    _
  %p36 = scmp.eq.s32.totalorder 0, 0
  // Predicated region
  $region42: #{actor_dense_forward.1} parent=0 // pred_check
    %p37 = pneg %p36
  $region43: #{actor_dense_forward.1} parent=0 // pred_check_branch
    %39 = sbr.rel (%p37) target = $region45
  $region44: #{actor_dense_forward.1} parent=0 // pred_region
    %v40 = vld [vmem:[%s1] sm:$0xff]
    %v41 = vld [vmem:[%s1 + $0x8] sm:$0xff]
    %v42 = vlaneseq
    %v43 = vand.u32 %v42, 127
    %44 = vset.pattern.permute.xlu0 0
    %45 = vperm.xlu0 %44, %v40
    %v46 = vpop.permute.xlu0 %45
    %47 = vset.pattern.permute.xlu0 0
    %48 = vperm.xlu0 %47, %v41
    %v49 = vpop.permute.xlu0 %48
    %vm50 = vcmp.eq.s32.totalorder %v43, %v46
    %vm51 = vcmp.eq.s32.totalorder %v43, %v49
    %v52 = vsel %vm50, 1, 0
    %v53 = vsel %vm51, 1, 0
    %v54 = vcvt.s32.f32 %v52
    %v55 = vcvt.s32.f32 %v53
    %v56 = vpack.c.bf16 %v55, %v54
    %v57 = vld [vmem:[%s7] sm:$0xff]
    %v58 = vld [vmem:[%s7 + $0x8] sm:$0xff]
    %v59 = vld [vmem:[%s7 + $0x10] sm:$0xff]
    %v60 = vld [vmem:[%s7 + $0x18] sm:$0xff]
    %v61 = vld [vmem:[%s7 + $0x20] sm:$0xff]
    %v62 = vld [vmem:[%s7 + $0x28] sm:$0xff]
    %v63 = vld [vmem:[%s7 + $0x30] sm:$0xff]
    %v64 = vld [vmem:[%s7 + $0x38] sm:$0xff]
    %v65 = vld [vmem:[%s7 + $0x40] sm:$0xff]
    %v66 = vld [vmem:[%s7 + $0x48] sm:$0xff]
    %v67 = vld [vmem:[%s7 + $0x50] sm:$0xff]
    %v68 = vld [vmem:[%s7 + $0x58] sm:$0xff]
    %v69 = vld [vmem:[%s7 + $0x60] sm:$0xff]
    %v70 = vld [vmem:[%s7 + $0x68] sm:$0xff]
    %v71 = vld [vmem:[%s7 + $0x70] sm:$0xff]
    %v72 = vld [vmem:[%s7 + $0x78] sm:$0xff]
    %v89 = vunpack.c.l.b16 %v57
    %v90 = vunpack.c.h.b16 %v57
    %v91 = vunpack.c.l.b16 %v58
    %v92 = vunpack.c.h.b16 %v58
    %v93 = vunpack.c.l.b16 %v59
    %v94 = vunpack.c.h.b16 %v59
    %v95 = vunpack.c.l.b16 %v60
    %v96 = vunpack.c.h.b16 %v60
    %v97 = vunpack.c.l.b16 %v61
    %v98 = vunpack.c.h.b16 %v61
    %v99 = vunpack.c.l.b16 %v62
    %v100 = vunpack.c.h.b16 %v62
    %v101 = vunpack.c.l.b16 %v63
    %v102 = vunpack.c.h.b16 %v63
    %v103 = vunpack.c.l.b16 %v64
    %v104 = vunpack.c.h.b16 %v64
    %v105 = vunpack.c.l.b16 %v65
    %v106 = vunpack.c.h.b16 %v65
    %v107 = vunpack.c.l.b16 %v66
    %v108 = vunpack.c.h.b16 %v66
    %v109 = vunpack.c.l.b16 %v67
    %v110 = vunpack.c.h.b16 %v67
    %v111 = vunpack.c.l.b16 %v68
    %v112 = vunpack.c.h.b16 %v68
    %v113 = vunpack.c.l.b16 %v69
    %v114 = vunpack.c.h.b16 %v69
    %v115 = vunpack.c.l.b16 %v70
    %v116 = vunpack.c.h.b16 %v70
    %v117 = vunpack.c.l.b16 %v71
    %v118 = vunpack.c.h.b16 %v71
    %v119 = vunpack.c.l.b16 %v72
    %v120 = vunpack.c.h.b16 %v72
    %v121 = vpack.c.b16 %v91, %v89
    %v122 = vpack.c.b16 %v92, %v90
    %v123 = vpack.c.b16 %v95, %v93
    %v124 = vpack.c.b16 %v96, %v94
    %v125 = vpack.c.b16 %v99, %v97
    %v126 = vpack.c.b16 %v100, %v98
    %v127 = vpack.c.b16 %v103, %v101
    %v128 = vpack.c.b16 %v104, %v102
    %v129 = vpack.c.b16 %v107, %v105
    %v130 = vpack.c.b16 %v108, %v106
    %v131 = vpack.c.b16 %v111, %v109
    %v132 = vpack.c.b16 %v112, %v110
    %v133 = vpack.c.b16 %v115, %v113
    %v134 = vpack.c.b16 %v116, %v114
    %v135 = vpack.c.b16 %v119, %v117
    %v136 = vpack.c.b16 %v120, %v118
    %153 = vmatprep.subr.bf16.mxu0 %v136
    %154 = vmatpush1.bf16.msra.mxu0 %v135
    %155 = vmatprep.subr.bf16.mxu0 %v134
    %156 = vmatpush1.bf16.msra.mxu0 %v133
    %157 = vmatprep.subr.bf16.mxu0 %v132
    %158 = vmatpush1.bf16.msra.mxu0 %v131
    %159 = vmatprep.subr.bf16.mxu0 %v130
    %160 = vmatpush1.bf16.msra.mxu0 %v129
    %161 = vmatprep.subr.bf16.mxu0 %v128
    %162 = vmatpush1.bf16.msra.mxu0 %v127
    %163 = vmatprep.subr.bf16.mxu0 %v126
    %164 = vmatpush1.bf16.msra.mxu0 %v125
    %165 = vmatprep.subr.bf16.mxu0 %v124
    %166 = vmatpush1.bf16.msra.mxu0 %v123
    %167 = vmatprep.subr.bf16.mxu0 %v122
    %168 = vmatpush1.bf16.msra.mxu0 %v121
    %169 = vmatprep.subr.bf16.mxu0 0
    %170 = vmatpush2.bf16.msra.mxu0 0
    %171 = vmatprep.subr.bf16.mxu0 0
    %172 = vmatpush2.bf16.msra.mxu0 0
    %173 = vmatprep.subr.bf16.mxu0 0
    %174 = vmatpush2.bf16.msra.mxu0 0
    %175 = vmatprep.subr.bf16.mxu0 0
    %176 = vmatpush2.bf16.msra.mxu0 0
    %177 = vmatprep.subr.bf16.mxu0 0
    %178 = vmatpush2.bf16.msra.mxu0 0
    %179 = vmatprep.subr.bf16.mxu0 0
    %180 = vmatpush2.bf16.msra.mxu0 0
    %181 = vmatprep.subr.bf16.mxu0 0
    %182 = vmatpush2.bf16.msra.mxu0 0
    %183 = vmatprep.subr.bf16.mxu0 0
    %184 = vmatpush2.bf16.msra.mxu0 0
    %185 = vmatprep.mubr.bf16.mxu0 0
    %186 = vmatmul.mubr.bf16.gmra.mxu0 %v56
    %v187 = vpop.f32.mrf.mxu0
    %v188 = vadd.f32 0.0, %v187
    %v189 = vpop.f32.mrf.mxu0
    %v190 = vadd.f32 0.0, %v189
    %v191 = vpop.f32.mrf.mxu0
    %v192 = vadd.f32 0.0, %v191
    %v193 = vpop.f32.mrf.mxu0
    %v194 = vadd.f32 0.0, %v193
    %195 = vdwg.mxu0
    %v196 = vld [vmem:[%s0] sm:$0xf]
    %v197 = vld [vmem:[%s0 + $0x4] sm:$0xf]
    %v198 = vld [vmem:[%s2] sm:$0xff]
    %v199 = vld [vmem:[%s2 + $0x8] sm:$0xff]
    %v200 = vld [vmem:[%s2 + $0x10] sm:$0xff]
    %v201 = vld [vmem:[%s2 + $0x18] sm:$0xff]
    %v202 = vld [vmem:[%s2 + $0x20] sm:$0xff]
    %v203 = vld [vmem:[%s2 + $0x28] sm:$0xff]
    %v204 = vld [vmem:[%s2 + $0x30] sm:$0xff]
    %v205 = vld [vmem:[%s2 + $0x38] sm:$0xff]
    %v206 = vld [vmem:[%s2 + $0x40] sm:$0xff]
    %v207 = vld [vmem:[%s2 + $0x48] sm:$0xff]
    %v208 = vld [vmem:[%s2 + $0x50] sm:$0xff]
    %v209 = vld [vmem:[%s2 + $0x58] sm:$0xff]
    %v210 = vld [vmem:[%s2 + $0x60] sm:$0xff]
    %v211 = vld [vmem:[%s2 + $0x68] sm:$0xff]
    %v212 = vld [vmem:[%s2 + $0x70] sm:$0xff]
    %v213 = vld [vmem:[%s2 + $0x78] sm:$0xff]
    %v214 = vld [vmem:[%s3] sm:$0x3]
    %v216 = vlaneseq
    %v217 = vshrl.u32 %v216, 7
    %v218 = vsub.s32 0, %v217
    %v219 = vrot.slane %v214, %v218
    %v220 = vlaneseq
    %v221 = vshrl.u32 %v220, 7
    %v222 = vsub.s32 1, %v221
    %v223 = vrot.slane %v214, %v222
    %v228 = vunpack.c.l.b16 %v196
    %v229 = vunpack.c.l.b16 %v197
    %v230 = vpack.c.b16 %v229, %v228
    %v248 = vunpack.c.l.b16 %v198
    %v249 = vunpack.c.h.b16 %v198
    %v250 = vunpack.c.l.b16 %v199
    %v251 = vunpack.c.h.b16 %v199
    %v252 = vunpack.c.l.b16 %v200
    %v253 = vunpack.c.h.b16 %v200
    %v254 = vunpack.c.l.b16 %v201
    %v255 = vunpack.c.h.b16 %v201
    %v256 = vunpack.c.l.b16 %v202
    %v257 = vunpack.c.h.b16 %v202
    %v258 = vunpack.c.l.b16 %v203
    %v259 = vunpack.c.h.b16 %v203
    %v260 = vunpack.c.l.b16 %v204
    %v261 = vunpack.c.h.b16 %v204
    %v262 = vunpack.c.l.b16 %v205
    %v263 = vunpack.c.h.b16 %v205
    %v264 = vunpack.c.l.b16 %v206
    %v265 = vunpack.c.h.b16 %v206
    %v266 = vunpack.c.l.b16 %v207
    %v267 = vunpack.c.h.b16 %v207
    %v268 = vunpack.c.l.b16 %v208
    %v269 = vunpack.c.h.b16 %v208
    %v270 = vunpack.c.l.b16 %v209
    %v271 = vunpack.c.h.b16 %v209
    %v272 = vunpack.c.l.b16 %v210
    %v273 = vunpack.c.h.b16 %v210
    %v274 = vunpack.c.l.b16 %v211
    %v275 = vunpack.c.h.b16 %v211
    %v276 = vunpack.c.l.b16 %v212
    %v277 = vunpack.c.h.b16 %v212
    %v278 = vunpack.c.l.b16 %v213
    %v279 = vunpack.c.h.b16 %v213
    %v280 = vpack.c.b16 %v250, %v248
    %v281 = vpack.c.b16 %v251, %v249
    %v282 = vpack.c.b16 %v254, %v252
    %v283 = vpack.c.b16 %v255, %v253
    %v284 = vpack.c.b16 %v258, %v256
    %v285 = vpack.c.b16 %v259, %v257
    %v286 = vpack.c.b16 %v262, %v260
    %v287 = vpack.c.b16 %v263, %v261
    %v288 = vpack.c.b16 %v266, %v264
    %v289 = vpack.c.b16 %v267, %v265
    %v290 = vpack.c.b16 %v270, %v268
    %v291 = vpack.c.b16 %v271, %v269
    %v292 = vpack.c.b16 %v274, %v272
    %v293 = vpack.c.b16 %v275, %v273
    %v294 = vpack.c.b16 %v278, %v276
    %v295 = vpack.c.b16 %v279, %v277
    %312 = vmatprep.subr.bf16.mxu0 %v295
    %313 = vmatpush1.bf16.msra.mxu0 %v294
    %314 = vmatprep.subr.bf16.mxu0 %v293
    %315 = vmatpush1.bf16.msra.mxu0 %v292
    %316 = vmatprep.subr.bf16.mxu0 %v291
    %317 = vmatpush1.bf16.msra.mxu0 %v290
    %318 = vmatprep.subr.bf16.mxu0 %v289
    %319 = vmatpush1.bf16.msra.mxu0 %v288
    %320 = vmatprep.subr.bf16.mxu0 %v287
    %321 = vmatpush1.bf16.msra.mxu0 %v286
    %322 = vmatprep.subr.bf16.mxu0 %v285
    %323 = vmatpush1.bf16.msra.mxu0 %v284
    %324 = vmatprep.subr.bf16.mxu0 %v283
    %325 = vmatpush1.bf16.msra.mxu0 %v282
    %326 = vmatprep.subr.bf16.mxu0 %v281
    %327 = vmatpush1.bf16.msra.mxu0 %v280
    %328 = vmatprep.subr.bf16.mxu0 0
    %329 = vmatpush2.bf16.msra.mxu0 0
    %330 = vmatprep.subr.bf16.mxu0 0
    %331 = vmatpush2.bf16.msra.mxu0 0
    %332 = vmatprep.subr.bf16.mxu0 0
    %333 = vmatpush2.bf16.msra.mxu0 0
    %334 = vmatprep.subr.bf16.mxu0 0
    %335 = vmatpush2.bf16.msra.mxu0 0
    %336 = vmatprep.subr.bf16.mxu0 0
    %337 = vmatpush2.bf16.msra.mxu0 0
    %338 = vmatprep.subr.bf16.mxu0 0
    %339 = vmatpush2.bf16.msra.mxu0 0
    %340 = vmatprep.subr.bf16.mxu0 0
    %341 = vmatpush2.bf16.msra.mxu0 0
    %342 = vmatprep.subr.bf16.mxu0 0
    %343 = vmatpush2.bf16.msra.mxu0 0
    %344 = vmatprep.mubr.bf16.mxu0 0
    %345 = vmatmul.mubr.bf16.gmra.mxu0 %v230
    %v346 = vpop.f32.mrf.mxu0
    %v347 = vadd.f32 %v219, %v346
    %v348 = vpop.f32.mrf.mxu0
    %v349 = vadd.f32 %v223, %v348
    %v350 = vpop.f32.mrf.mxu0
    %v351 = vadd.f32 %v219, %v350
    %v352 = vpop.f32.mrf.mxu0
    %v353 = vadd.f32 %v223, %v352
    %354 = vdwg.mxu0
    %v355 = vmax.f32 %v347, 0.0
    %v356 = vmax.f32 %v349, 0.0
    %v357 = vmax.f32 %v351, 0.0
    %v358 = vmax.f32 %v353, 0.0
    %v359 = vpack.c.bf16 %v357, %v355
    %v360 = vpack.c.bf16 %v358, %v356
    %v361 = vld [vmem:[%s4] sm:$0xf]
    %v362 = vld [vmem:[%s4 + $0x4] sm:$0xf]
    %v363 = vld [vmem:[%s4 + $0x8] sm:$0xf]
    %v364 = vld [vmem:[%s4 + $0xc] sm:$0xf]
    %v365 = vld [vmem:[%s4 + $0x10] sm:$0xf]
    %v366 = vld [vmem:[%s4 + $0x14] sm:$0xf]
    %v367 = vld [vmem:[%s4 + $0x18] sm:$0xf]
    %v368 = vld [vmem:[%s4 + $0x1c] sm:$0xf]
    %v369 = vld [vmem:[%s4 + $0x20] sm:$0xf]
    %v370 = vld [vmem:[%s4 + $0x24] sm:$0xf]
    %v371 = vld [vmem:[%s4 + $0x28] sm:$0xf]
    %v372 = vld [vmem:[%s4 + $0x2c] sm:$0xf]
    %v373 = vld [vmem:[%s4 + $0x30] sm:$0xf]
    %v374 = vld [vmem:[%s4 + $0x34] sm:$0xf]
    %v375 = vld [vmem:[%s4 + $0x38] sm:$0xf]
    %v376 = vld [vmem:[%s4 + $0x3c] sm:$0xf]
    %v377 = vld [vmem:[%s4 + $0x40] sm:$0xf]
    %v378 = vld [vmem:[%s4 + $0x44] sm:$0xf]
    %v379 = vld [vmem:[%s4 + $0x48] sm:$0xf]
    %v380 = vld [vmem:[%s4 + $0x4c] sm:$0xf]
    %v381 = vld [vmem:[%s4 + $0x50] sm:$0xf]
    %v382 = vld [vmem:[%s4 + $0x54] sm:$0xf]
    %v383 = vld [vmem:[%s4 + $0x58] sm:$0xf]
    %v384 = vld [vmem:[%s4 + $0x5c] sm:$0xf]
    %v385 = vld [vmem:[%s4 + $0x60] sm:$0xf]
    %v386 = vld [vmem:[%s4 + $0x64] sm:$0xf]
    %v387 = vld [vmem:[%s4 + $0x68] sm:$0xf]
    %v388 = vld [vmem:[%s4 + $0x6c] sm:$0xf]
    %v389 = vld [vmem:[%s4 + $0x70] sm:$0xf]
    %v390 = vld [vmem:[%s4 + $0x74] sm:$0xf]
    %v391 = vld [vmem:[%s4 + $0x78] sm:$0xf]
    %v392 = vld [vmem:[%s4 + $0x7c] sm:$0xf]
    %v393 = vpack.c.bf16 %v192, %v188
    %v394 = vpack.c.bf16 %v194, %v190
    %v395 = vld [vmem:[%s5] sm:$0xf]
    %v396 = vld [vmem:[%s5 + $0x4] sm:$0xf]
    %v397 = vld [vmem:[%s5 + $0x8] sm:$0xf]
    %v398 = vld [vmem:[%s5 + $0xc] sm:$0xf]
    %v399 = vld [vmem:[%s5 + $0x10] sm:$0xf]
    %v400 = vld [vmem:[%s5 + $0x14] sm:$0xf]
    %v401 = vld [vmem:[%s5 + $0x18] sm:$0xf]
    %v402 = vld [vmem:[%s5 + $0x1c] sm:$0xf]
    %v403 = vld [vmem:[%s5 + $0x20] sm:$0xf]
    %v404 = vld [vmem:[%s5 + $0x24] sm:$0xf]
    %v405 = vld [vmem:[%s5 + $0x28] sm:$0xf]
    %v406 = vld [vmem:[%s5 + $0x2c] sm:$0xf]
    %v407 = vld [vmem:[%s5 + $0x30] sm:$0xf]
    %v408 = vld [vmem:[%s5 + $0x34] sm:$0xf]
    %v409 = vld [vmem:[%s5 + $0x38] sm:$0xf]
    %v410 = vld [vmem:[%s5 + $0x3c] sm:$0xf]
    %v411 = vld [vmem:[%s5 + $0x40] sm:$0xf]
    %v412 = vld [vmem:[%s5 + $0x44] sm:$0xf]
    %v413 = vld [vmem:[%s5 + $0x48] sm:$0xf]
    %v414 = vld [vmem:[%s5 + $0x4c] sm:$0xf]
    %v415 = vld [vmem:[%s5 + $0x50] sm:$0xf]
    %v416 = vld [vmem:[%s5 + $0x54] sm:$0xf]
    %v417 = vld [vmem:[%s5 + $0x58] sm:$0xf]
    %v418 = vld [vmem:[%s5 + $0x5c] sm:$0xf]
    %v419 = vld [vmem:[%s5 + $0x60] sm:$0xf]
    %v420 = vld [vmem:[%s5 + $0x64] sm:$0xf]
    %v421 = vld [vmem:[%s5 + $0x68] sm:$0xf]
    %v422 = vld [vmem:[%s5 + $0x6c] sm:$0xf]
    %v423 = vld [vmem:[%s5 + $0x70] sm:$0xf]
    %v424 = vld [vmem:[%s5 + $0x74] sm:$0xf]
    %v425 = vld [vmem:[%s5 + $0x78] sm:$0xf]
    %v426 = vld [vmem:[%s5 + $0x7c] sm:$0xf]
    %v459 = vunpack.c.l.b16 %v395
    %v460 = vunpack.c.l.b16 %v396
    %v461 = vunpack.c.l.b16 %v397
    %v462 = vunpack.c.l.b16 %v398
    %v463 = vunpack.c.l.b16 %v399
    %v464 = vunpack.c.l.b16 %v400
    %v465 = vunpack.c.l.b16 %v401
    %v466 = vunpack.c.l.b16 %v402
    %v467 = vunpack.c.l.b16 %v403
    %v468 = vunpack.c.l.b16 %v404
    %v469 = vunpack.c.l.b16 %v405
    %v470 = vunpack.c.l.b16 %v406
    %v471 = vunpack.c.l.b16 %v407
    %v472 = vunpack.c.l.b16 %v408
    %v473 = vunpack.c.l.b16 %v409
    %v474 = vunpack.c.l.b16 %v410
    %v475 = vunpack.c.l.b16 %v411
    %v476 = vunpack.c.l.b16 %v412
    %v477 = vunpack.c.l.b16 %v413
    %v478 = vunpack.c.l.b16 %v414
    %v479 = vunpack.c.l.b16 %v415
    %v480 = vunpack.c.l.b16 %v416
    %v481 = vunpack.c.l.b16 %v417
    %v482 = vunpack.c.l.b16 %v418
    %v483 = vunpack.c.l.b16 %v419
    %v484 = vunpack.c.l.b16 %v420
    %v485 = vunpack.c.l.b16 %v421
    %v486 = vunpack.c.l.b16 %v422
    %v487 = vunpack.c.l.b16 %v423
    %v488 = vunpack.c.l.b16 %v424
    %v489 = vunpack.c.l.b16 %v425
    %v490 = vunpack.c.l.b16 %v426
    %v491 = vpack.c.b16 %v460, %v459
    %v492 = vpack.c.b16 %v462, %v461
    %v493 = vpack.c.b16 %v464, %v463
    %v494 = vpack.c.b16 %v466, %v465
    %v495 = vpack.c.b16 %v468, %v467
    %v496 = vpack.c.b16 %v470, %v469
    %v497 = vpack.c.b16 %v472, %v471
    %v498 = vpack.c.b16 %v474, %v473
    %v499 = vpack.c.b16 %v476, %v475
    %v500 = vpack.c.b16 %v478, %v477
    %v501 = vpack.c.b16 %v480, %v479
    %v502 = vpack.c.b16 %v482, %v481
    %v503 = vpack.c.b16 %v484, %v483
    %v504 = vpack.c.b16 %v486, %v485
    %v505 = vpack.c.b16 %v488, %v487
    %v506 = vpack.c.b16 %v490, %v489
    %523 = vmatprep.subr.bf16.mxu0 0
    %524 = vmatpush1.bf16.msra.mxu0 %v498
    %525 = vmatprep.subr.bf16.mxu0 0
    %526 = vmatpush1.bf16.msra.mxu0 %v497
    %527 = vmatprep.subr.bf16.mxu0 0
    %528 = vmatpush1.bf16.msra.mxu0 %v496
    %529 = vmatprep.subr.bf16.mxu0 0
    %530 = vmatpush1.bf16.msra.mxu0 %v495
    %531 = vmatprep.subr.bf16.mxu0 0
    %532 = vmatpush1.bf16.msra.mxu0 %v494
    %533 = vmatprep.subr.bf16.mxu0 0
    %534 = vmatpush1.bf16.msra.mxu0 %v493
    %535 = vmatprep.subr.bf16.mxu0 0
    %536 = vmatpush1.bf16.msra.mxu0 %v492
    %537 = vmatprep.subr.bf16.mxu0 0
    %538 = vmatpush1.bf16.msra.mxu0 %v491
    %539 = vmatprep.subr.bf16.mxu0 0
    %540 = vmatpush2.bf16.msra.mxu0 %v506
    %541 = vmatprep.subr.bf16.mxu0 0
    %542 = vmatpush2.bf16.msra.mxu0 %v505
    %543 = vmatprep.subr.bf16.mxu0 0
    %544 = vmatpush2.bf16.msra.mxu0 %v504
    %545 = vmatprep.subr.bf16.mxu0 0
    %546 = vmatpush2.bf16.msra.mxu0 %v503
    %547 = vmatprep.subr.bf16.mxu0 0
    %548 = vmatpush2.bf16.msra.mxu0 %v502
    %549 = vmatprep.subr.bf16.mxu0 0
    %550 = vmatpush2.bf16.msra.mxu0 %v501
    %551 = vmatprep.subr.bf16.mxu0 0
    %552 = vmatpush2.bf16.msra.mxu0 %v500
    %553 = vmatprep.subr.bf16.mxu0 0
    %554 = vmatpush2.bf16.msra.mxu0 %v499
    %555 = vmatprep.mubr.bf16.mxu0 %v394
    %556 = vmatmul.mubr.bf16.gmra.mxu0 %v393
    %v557 = vpop.f32.mrf.mxu0
    %v558 = vadd.f32 0.0, %v557
    %v559 = vpop.f32.mrf.mxu0
    %v560 = vpop.f32.mrf.mxu0
    %v561 = vadd.f32 0.0, %v560
    %v562 = vpop.f32.mrf.mxu0
    %563 = vdwg.mxu0
    %v596 = vunpack.c.l.b16 %v361
    %v597 = vunpack.c.l.b16 %v362
    %v598 = vunpack.c.l.b16 %v363
    %v599 = vunpack.c.l.b16 %v364
    %v600 = vunpack.c.l.b16 %v365
    %v601 = vunpack.c.l.b16 %v366
    %v602 = vunpack.c.l.b16 %v367
    %v603 = vunpack.c.l.b16 %v368
    %v604 = vunpack.c.l.b16 %v369
    %v605 = vunpack.c.l.b16 %v370
    %v606 = vunpack.c.l.b16 %v371
    %v607 = vunpack.c.l.b16 %v372
    %v608 = vunpack.c.l.b16 %v373
    %v609 = vunpack.c.l.b16 %v374
    %v610 = vunpack.c.l.b16 %v375
    %v611 = vunpack.c.l.b16 %v376
    %v612 = vunpack.c.l.b16 %v377
    %v613 = vunpack.c.l.b16 %v378
    %v614 = vunpack.c.l.b16 %v379
    %v615 = vunpack.c.l.b16 %v380
    %v616 = vunpack.c.l.b16 %v381
    %v617 = vunpack.c.l.b16 %v382
    %v618 = vunpack.c.l.b16 %v383
    %v619 = vunpack.c.l.b16 %v384
    %v620 = vunpack.c.l.b16 %v385
    %v621 = vunpack.c.l.b16 %v386
    %v622 = vunpack.c.l.b16 %v387
    %v623 = vunpack.c.l.b16 %v388
    %v624 = vunpack.c.l.b16 %v389
    %v625 = vunpack.c.l.b16 %v390
    %v626 = vunpack.c.l.b16 %v391
    %v627 = vunpack.c.l.b16 %v392
    %v628 = vpack.c.b16 %v597, %v596
    %v629 = vpack.c.b16 %v599, %v598
    %v630 = vpack.c.b16 %v601, %v600
    %v631 = vpack.c.b16 %v603, %v602
    %v632 = vpack.c.b16 %v605, %v604
    %v633 = vpack.c.b16 %v607, %v606
    %v634 = vpack.c.b16 %v609, %v608
    %v635 = vpack.c.b16 %v611, %v610
    %v636 = vpack.c.b16 %v613, %v612
    %v637 = vpack.c.b16 %v615, %v614
    %v638 = vpack.c.b16 %v617, %v616
    %v639 = vpack.c.b16 %v619, %v618
    %v640 = vpack.c.b16 %v621, %v620
    %v641 = vpack.c.b16 %v623, %v622
    %v642 = vpack.c.b16 %v625, %v624
    %v643 = vpack.c.b16 %v627, %v626
    %660 = vmatprep.subr.bf16.mxu0 0
    %661 = vmatpush1.bf16.msra.mxu0 %v635
    %662 = vmatprep.subr.bf16.mxu0 0
    %663 = vmatpush1.bf16.msra.mxu0 %v634
    %664 = vmatprep.subr.bf16.mxu0 0
    %665 = vmatpush1.bf16.msra.mxu0 %v633
    %666 = vmatprep.subr.bf16.mxu0 0
    %667 = vmatpush1.bf16.msra.mxu0 %v632
    %668 = vmatprep.subr.bf16.mxu0 0
    %669 = vmatpush1.bf16.msra.mxu0 %v631
    %670 = vmatprep.subr.bf16.mxu0 0
    %671 = vmatpush1.bf16.msra.mxu0 %v630
    %672 = vmatprep.subr.bf16.mxu0 0
    %673 = vmatpush1.bf16.msra.mxu0 %v629
    %674 = vmatprep.subr.bf16.mxu0 0
    %675 = vmatpush1.bf16.msra.mxu0 %v628
    %676 = vmatprep.subr.bf16.mxu0 0
    %677 = vmatpush2.bf16.msra.mxu0 %v643
    %678 = vmatprep.subr.bf16.mxu0 0
    %679 = vmatpush2.bf16.msra.mxu0 %v642
    %680 = vmatprep.subr.bf16.mxu0 0
    %681 = vmatpush2.bf16.msra.mxu0 %v641
    %682 = vmatprep.subr.bf16.mxu0 0
    %683 = vmatpush2.bf16.msra.mxu0 %v640
    %684 = vmatprep.subr.bf16.mxu0 0
    %685 = vmatpush2.bf16.msra.mxu0 %v639
    %686 = vmatprep.subr.bf16.mxu0 0
    %687 = vmatpush2.bf16.msra.mxu0 %v638
    %688 = vmatprep.subr.bf16.mxu0 0
    %689 = vmatpush2.bf16.msra.mxu0 %v637
    %690 = vmatprep.subr.bf16.mxu0 0
    %691 = vmatpush2.bf16.msra.mxu0 %v636
    %692 = vmatprep.mubr.bf16.mxu0 %v360
    %693 = vmatmul.mubr.bf16.gmra.mxu0 %v359
    %v694 = vpop.f32.mrf.mxu0
    %v695 = vadd.f32 %v558, %v694
    %v696 = vpop.f32.mrf.mxu0
    %v697 = vpop.f32.mrf.mxu0
    %v698 = vadd.f32 %v561, %v697
    %v699 = vpop.f32.mrf.mxu0
    %700 = vdwg.mxu0
    %v701 = vld [vmem:[%s6] sm:$0x1]
    %v703 = vlaneseq
    %v704 = vshrl.u32 %v703, 7
    %v705 = vsub.s32 0, %v704
    %v706 = vrot.slane %v701, %v705
    %v708 = vadd.f32 %v695, %v706
    %v709 = vadd.f32 %v698, %v706
    %v710 = vmax.f32 %v708, 0.0
    %v711 = vmax.f32 %v709, 0.0
    %v712 = vpack.c.bf16 %v711, %v710
    %v714 = vunpack.c.l.b16 %v712
    %v715 = vunpack.c.h.b16 %v712
    %v716 = vpack.c.b16 %v714, %v714
    %v717 = vpack.c.b16 %v715, %v715
    %720 = vst [vmem:[#allocation2] sm:$0xf] %v716
    %721 = vst [vmem:[#allocation2 + $0x4] sm:$0xf] %v717
  $region45: #{actor_dense_forward.1} parent=0 // pred_fallthru
    _
  %v722 = vld [vmem:[#allocation2] sm:$0xf]
  %v723 = vld [vmem:[#allocation2 + $0x4] sm:$0xf]
  %v724 = vld [vmem:[%s8] sm:$0xf]
  %v725 = vld [vmem:[%s8 + $0x4] sm:$0xf]
  %v726 = vld [vmem:[%s8 + $0x8] sm:$0xf]
  %v727 = vld [vmem:[%s8 + $0xc] sm:$0xf]
  %v728 = vld [vmem:[%s8 + $0x10] sm:$0xf]
  %v729 = vld [vmem:[%s8 + $0x14] sm:$0xf]
  %v730 = vld [vmem:[%s8 + $0x18] sm:$0xf]
  %v731 = vld [vmem:[%s8 + $0x1c] sm:$0xf]
  %v732 = vld [vmem:[%s8 + $0x20] sm:$0xf]
  %v733 = vld [vmem:[%s8 + $0x24] sm:$0xf]
  %v734 = vld [vmem:[%s8 + $0x28] sm:$0xf]
  %v735 = vld [vmem:[%s8 + $0x2c] sm:$0xf]
  %v736 = vld [vmem:[%s8 + $0x30] sm:$0xf]
  %v737 = vld [vmem:[%s8 + $0x34] sm:$0xf]
  %v738 = vld [vmem:[%s8 + $0x38] sm:$0xf]
  %v739 = vld [vmem:[%s8 + $0x3c] sm:$0xf]
  %v740 = vld [vmem:[%s9] sm:$0x1]
  %v742 = vlaneseq
  %v743 = vshrl.u32 %v742, 7
  %v744 = vsub.s32 0, %v743
  %v745 = vrot.slane %v740, %v744
  %v749 = vunpack.c.l.b16 %v722
  %v750 = vunpack.c.l.b16 %v723
  %v751 = vpack.c.b16 %v750, %v749
  %v769 = vunpack.c.l.b16 %v724
  %v770 = vunpack.c.l.b16 %v725
  %v771 = vunpack.c.l.b16 %v726
  %v772 = vunpack.c.l.b16 %v727
  %v773 = vunpack.c.l.b16 %v728
  %v774 = vunpack.c.l.b16 %v729
  %v775 = vunpack.c.l.b16 %v730
  %v776 = vunpack.c.l.b16 %v731
  %v777 = vunpack.c.l.b16 %v732
  %v778 = vunpack.c.l.b16 %v733
  %v779 = vunpack.c.l.b16 %v734
  %v780 = vunpack.c.l.b16 %v735
  %v781 = vunpack.c.l.b16 %v736
  %v782 = vunpack.c.l.b16 %v737
  %v783 = vunpack.c.l.b16 %v738
  %v784 = vunpack.c.l.b16 %v739
  %v785 = vpack.c.b16 %v770, %v769
  %v786 = vpack.c.b16 %v772, %v771
  %v787 = vpack.c.b16 %v774, %v773
  %v788 = vpack.c.b16 %v776, %v775
  %v789 = vpack.c.b16 %v778, %v777
  %v790 = vpack.c.b16 %v780, %v779
  %v791 = vpack.c.b16 %v782, %v781
  %v792 = vpack.c.b16 %v784, %v783
  %801 = vmatprep.subr.bf16.mxu0 0
  %802 = vmatpush1.bf16.msra.mxu0 %v792
  %803 = vmatprep.subr.bf16.mxu0 0
  %804 = vmatpush1.bf16.msra.mxu0 %v791
  %805 = vmatprep.subr.bf16.mxu0 0
  %806 = vmatpush1.bf16.msra.mxu0 %v790
  %807 = vmatprep.subr.bf16.mxu0 0
  %808 = vmatpush1.bf16.msra.mxu0 %v789
  %809 = vmatprep.subr.bf16.mxu0 0
  %810 = vmatpush1.bf16.msra.mxu0 %v788
  %811 = vmatprep.subr.bf16.mxu0 0
  %812 = vmatpush1.bf16.msra.mxu0 %v787
  %813 = vmatprep.subr.bf16.mxu0 0
  %814 = vmatpush1.bf16.msra.mxu0 %v786
  %815 = vmatprep.subr.bf16.mxu0 0
  %816 = vmatpush1.bf16.msra.mxu0 %v785
  %817 = vmatprep.subr.bf16.mxu0 0
  %818 = vmatpush2.bf16.msra.mxu0 0
  %819 = vmatprep.subr.bf16.mxu0 0
  %820 = vmatpush2.bf16.msra.mxu0 0
  %821 = vmatprep.subr.bf16.mxu0 0
  %822 = vmatpush2.bf16.msra.mxu0 0
  %823 = vmatprep.subr.bf16.mxu0 0
  %824 = vmatpush2.bf16.msra.mxu0 0
  %825 = vmatprep.subr.bf16.mxu0 0
  %826 = vmatpush2.bf16.msra.mxu0 0
  %827 = vmatprep.subr.bf16.mxu0 0
  %828 = vmatpush2.bf16.msra.mxu0 0
  %829 = vmatprep.subr.bf16.mxu0 0
  %830 = vmatpush2.bf16.msra.mxu0 0
  %831 = vmatprep.subr.bf16.mxu0 0
  %832 = vmatpush2.bf16.msra.mxu0 0
  %833 = vmatprep.mubr.bf16.mxu0 0
  %834 = vmatmul.mubr.bf16.gmra.mxu0 %v751
  %v835 = vpop.f32.mrf.mxu0
  %v836 = vadd.f32 %v745, %v835
  %v837 = vpop.f32.mrf.mxu0
  %v838 = vpop.f32.mrf.mxu0
  %v839 = vadd.f32 %v745, %v838
  %v840 = vpop.f32.mrf.mxu0
  %841 = vdwg.mxu0
  %v842 = vxor.u32 %v836, 2147483648
  %v843 = vxor.u32 %v839, 2147483648
  %v844 = vmul.f32 %v842, 1.442695
  %v845 = vpow.pop %v844
  %v846 = vmul.f32 %v843, 1.442695
  %v847 = vpow.pop %v846
  %v848 = vadd.f32 %v845, 1.0
  %v849 = vadd.f32 %v847, 1.0
  %v850 = vrcp.pop %v848
  %v851 = vmul.f32 1.0, %v850
  %v852 = vrcp.pop %v849
  %v853 = vmul.f32 1.0, %v852
  %v854 = vmul.f32 %v851, 30.0
  %v855 = vmul.f32 %v853, 30.0
  %856 = vst [vmem:[%s10] sm:$0xff] %v854
  %857 = vst [vmem:[%s10 + $0x8] sm:$0xff] %v855
  // Predicated region
  $region46: #{actor_dense_forward.1} parent=0 // pred_check
    _
  $region47: #{actor_dense_forward.1} parent=0 // pred_check_branch
    %859 = sbr.rel (0) target = $region49
  $region48: #{actor_dense_forward.1} parent=0 // pred_region
    _
  $region49: #{actor_dense_forward.1} parent=0 // pred_fallthru
    _
  // Predicated region
  $region50: #{actor_dense_forward.1} parent=0 // pred_check
    _
  $region51: #{actor_dense_forward.1} parent=0 // pred_check_branch
    %861 = sbr.rel (0) target = $region53
  $region52: #{actor_dense_forward.1} parent=0 // pred_region
    _
  $region53: #{actor_dense_forward.1} parent=0 // pred_fallthru
    _

</llo_original>
